<compile_context>
chip_gen: v5e
topology: v5e:2x2
jax: 0.10.0
libtpu: 0.0.40
codegen_flags: <defaults>
</compile_context>

<pallas_src>
import jax
import jax.numpy as jnp
from jax import lax
from jax.experimental import pallas as pl
from jax.experimental.pallas import tpu as pltpu


def angular_loss_kernel(x_ref, y_ref, vals_ref):
    # x_ref / y_ref: (D, TB) tiles — samples on lanes, features on sublanes.
    x = x_ref[...].astype(jnp.float32)
    y = y_ref[...].astype(jnp.float32)

    eps2 = jnp.float32(1e-16)  # (1e-8)^2 — PyTorch CosineSimilarity eps clamp

    dot = jnp.sum(x * y, axis=0, keepdims=True)   # (1, TB)
    nx2 = jnp.sum(x * x, axis=0, keepdims=True)   # (1, TB)
    ny2 = jnp.sum(y * y, axis=0, keepdims=True)   # (1, TB)

    inv_nx = lax.rsqrt(jnp.maximum(nx2, eps2))    # EUP; == 1/max(||x||, eps)
    inv_ny = lax.rsqrt(jnp.maximum(ny2, eps2))

    vals_ref[...] = 1.0 - dot * inv_nx * inv_ny   # lane-dense (1, TB) store


def _round_up(x, m):
    return ((x + m - 1) // m) * m


def angular_loss(model_output, targets, mean_reduce=True, block_b=1024):
    """Pallas implementation of AngularLoss.forward (model_output_type='scalar')."""
    # TODO(synk): model_output_type != 'scalar' (CosineSimilarity over dim=2 on 3-D
    # inputs) is not implemented; only the dim=1 path used by the default config is.
    assert model_output.shape == targets.shape
    B, D = model_output.shape

    # (D, B): samples dense along lanes, tiny feature axis along sublanes.
    x = jnp.transpose(model_output)
    y = jnp.transpose(targets)

    # Lane-dense batch tile: multiple of 128, capped by block_b.
    tb = min(_round_up(block_b, 128), _round_up(B, 128))
    b_pad = _round_up(B, tb)
    if b_pad != B:
        pad = ((0, 0), (0, b_pad - B))
        # Zero padding is safe: zero vectors give cos=0 (no NaN) and the padded
        # columns are sliced away before the mean.
        x = jnp.pad(x, pad)
        y = jnp.pad(y, pad)

    grid = (b_pad // tb,)

    vals = pl.pallas_call(
        angular_loss_kernel,
        out_shape=jax.ShapeDtypeStruct((1, b_pad), jnp.float32),
        grid=grid,
        in_specs=[
            pl.BlockSpec((D, tb), lambda i: (0, i)),
            pl.BlockSpec((D, tb), lambda i: (0, i)),
        ],
        out_specs=pl.BlockSpec((1, tb), lambda i: (0, i)),
        compiler_params=pltpu.CompilerParams(
            dimension_semantics=("parallel",),
            vmem_limit_bytes=32 * 1024 * 1024,
        ),
    )(x, y)

    vals = vals[0, :B]
    if mean_reduce:
        return jnp.mean(vals)
    return vals


def _reference(model_output, targets, mean_reduce=True):
    # Pure-JAX reference mirroring torch.nn.CosineSimilarity(dim=1), eps=1e-8.
    eps = 1e-8
    dot = jnp.sum(model_output * targets, axis=1)
    nx = jnp.maximum(jnp.linalg.norm(model_output, axis=1), eps)
    ny = jnp.maximum(jnp.linalg.norm(targets, axis=1), eps)
    vals = 1.0 - dot / (nx * ny)
    return vals.mean() if mean_reduce else vals


if __name__ == "__main__":
    key = jax.random.PRNGKey(0)

    # Case 1: small shape consistent with the module's default use.
    k1, k2, k3, k4 = jax.random.split(key, 4)
    B, D = 8, 32
    mo = jax.random.normal(k1, (B, D), dtype=jnp.float32)
    tg = jax.random.normal(k2, (B, D), dtype=jnp.float32)

    out_mean = angular_loss(mo, tg, mean_reduce=True)
    out_vals = angular_loss(mo, tg, mean_reduce=False)
    jax.block_until_ready(out_mean)
    jax.block_until_ready(out_vals)

    assert jnp.allclose(out_mean, _reference(mo, tg, True), atol=1e-5, rtol=1e-5)
    assert jnp.allclose(out_vals, _reference(mo, tg, False), atol=1e-5, rtol=1e-5)

    # Case 2: production-like tiny D with a batch that is not a multiple of 128
    # (exercises lane-dense tiling + padding + trim).
    B2, D2 = 300, 3
    mo2 = jax.random.normal(k3, (B2, D2), dtype=jnp.float32)
    tg2 = jax.random.normal(k4, (B2, D2), dtype=jnp.float32)

    out_mean2 = angular_loss(mo2, tg2, mean_reduce=True)
    out_vals2 = angular_loss(mo2, tg2, mean_reduce=False)
    jax.block_until_ready(out_mean2)
    jax.block_until_ready(out_vals2)

    assert jnp.allclose(out_mean2, _reference(mo2, tg2, True), atol=1e-5, rtol=1e-5)
    assert jnp.allclose(out_vals2, _reference(mo2, tg2, False), atol=1e-5, rtol=1e-5)

    print("KERNEL_OK")
</pallas_src>

<mosaic_0001>
module attributes {stable_mosaic.version = 11 : i64} {
  func.func @angular_loss_kernel(%arg0: i32, %arg1: memref<32x128xf32, #tpu.memory_space<vmem>>, %arg2: memref<32x128xf32, #tpu.memory_space<vmem>>, %arg3: memref<1x128xf32, #tpu.memory_space<vmem>>) attributes {dimension_semantics = [#tpu.dimension_semantics<parallel>], iteration_bounds = array<i64: 1>, scalar_prefetch = 0 : i64, scratch_operands = 0 : i64, tpu.core_type = #tpu.core_type<tc>, window_params = [{transform_indices = @transform_0, window_bounds = array<i64: 32, 128>}, {transform_indices = @transform_1, window_bounds = array<i64: 32, 128>}, {transform_indices = @transform_2, window_bounds = array<i64: 1, 128>}]} {
    %c0 = arith.constant 0 : index
    %c0_0 = arith.constant 0 : index
    %0 = vector.load %arg1[%c0, %c0_0] : memref<32x128xf32, #tpu.memory_space<vmem>>, vector<32x128xf32>
    %c0_1 = arith.constant 0 : index
    %c0_2 = arith.constant 0 : index
    %1 = vector.load %arg2[%c0_1, %c0_2] : memref<32x128xf32, #tpu.memory_space<vmem>>, vector<32x128xf32>
    %2 = arith.mulf %0, %1 : vector<32x128xf32>
    %cst = arith.constant dense<0.000000e+00> : vector<128xf32>
    %3 = vector.multi_reduction <add>, %2, %cst [0] : vector<32x128xf32> to vector<128xf32>
    %4 = vector.shape_cast %3 : vector<128xf32> to vector<1x128xf32>
    %5 = arith.mulf %0, %0 : vector<32x128xf32>
    %cst_3 = arith.constant dense<0.000000e+00> : vector<128xf32>
    %6 = vector.multi_reduction <add>, %5, %cst_3 [0] : vector<32x128xf32> to vector<128xf32>
    %7 = vector.shape_cast %6 : vector<128xf32> to vector<1x128xf32>
    %8 = arith.mulf %1, %1 : vector<32x128xf32>
    %cst_4 = arith.constant dense<0.000000e+00> : vector<128xf32>
    %9 = vector.multi_reduction <add>, %8, %cst_4 [0] : vector<32x128xf32> to vector<128xf32>
    %10 = vector.shape_cast %9 : vector<128xf32> to vector<1x128xf32>
    %cst_5 = arith.constant 1.000000e-16 : f32
    %11 = vector.broadcast %cst_5 : f32 to vector<1x128xf32>
    %12 = arith.maximumf %7, %11 : vector<1x128xf32>
    %13 = math.rsqrt %12 : vector<1x128xf32>
    %cst_6 = arith.constant 1.000000e-16 : f32
    %14 = vector.broadcast %cst_6 : f32 to vector<1x128xf32>
    %15 = arith.maximumf %10, %14 : vector<1x128xf32>
    %16 = math.rsqrt %15 : vector<1x128xf32>
    %17 = arith.mulf %4, %13 : vector<1x128xf32>
    %18 = arith.mulf %17, %16 : vector<1x128xf32>
    %cst_7 = arith.constant 1.000000e+00 : f32
    %19 = vector.broadcast %cst_7 : f32 to vector<1x128xf32>
    %20 = arith.subf %19, %18 : vector<1x128xf32>
    %c0_8 = arith.constant 0 : index
    %c0_9 = arith.constant 0 : index
    %21 = vector.load %arg3[%c0_8, %c0_9] : memref<1x128xf32, #tpu.memory_space<vmem>>, vector<1x128xf32>
    tpu.vector_store %arg3[%c0_8, %c0_9], %20 {strides = array<i32>} : memref<1x128xf32, #tpu.memory_space<vmem>>, vector<1x128xf32>,
    return
  }
  func.func @transform_0(%arg0: i32) -> (i32, i32) {
    %c0_i32 = arith.constant 0 : i32
    %c0_i32_0 = arith.constant 0 : i32
    return %c0_i32, %arg0 : i32, i32
  }
  func.func @transform_1(%arg0: i32) -> (i32, i32) {
    %c0_i32 = arith.constant 0 : i32
    %c0_i32_0 = arith.constant 0 : i32
    return %c0_i32, %arg0 : i32, i32
  }
  func.func @transform_2(%arg0: i32) -> (i32, i32) {
    %c0_i32 = arith.constant 0 : i32
    %c0_i32_0 = arith.constant 0 : i32
    return %c0_i32, %arg0 : i32, i32
  }
}

</mosaic_0001>

<llo_original>
// kernel: tpu_custom_call.1
$region0: #{tpu_custom_call.1}
  #allocation0 [shape = 'u32[]', space=smem, size = 0x4, offset = 0x4, fixed_abs, tag = 'smem constant byte address 0x4 - core index']
  #allocation1 [shape = 'u32[72,128]{1,0:T(1,128)}', space=vmem, size = 0x9000, scoped, tag = 'internal scratch']
  %s0 = inlined_call_operand.hbm [shape: f32[32,128], index: 0, kind: input, shape index: {}]
  %s1 = inlined_call_operand.hbm [shape: f32[32,128], index: 1, kind: input, shape index: {}]
  %s2 = inlined_call_operand.hbm [shape: f32[1,128], index: 2, kind: output, shape index: {}]
  %s3 = sld [smem:[#allocation0]]
  $region26: #{tpu_custom_call.1} parent=0
    _
  %s5 = ssub.s32 1, %s3
  %s6 = scalar_select 0, %s5, %s3
  $region1: #{tpu_custom_call.1} parent=0
    #allocation2 [shape = 'u8[16384]{0}', space=vmem, size = 0x4000, scoped, tag = 'input window, operand 0, single buffered']
    #allocation3 [shape = 's32[1]{0}', space=sflag, size = 0x4, scoped, tag = 'scoped memory for tpu_custom_call.1']
    #allocation4 [shape = 's32[1]{0}', space=sflag, size = 0x4, scoped, tag = 'scoped memory for tpu_custom_call.1']
    #allocation5 [shape = 'u8[16384]{0}', space=vmem, size = 0x4000, scoped, tag = 'input window, operand 1, single buffered']
    #allocation6 [shape = 's32[1]{0}', space=sflag, size = 0x4, scoped, tag = 'scoped memory for tpu_custom_call.1']
    #allocation7 [shape = 'u8[512]{0}', space=vmem, size = 0x400, scoped, tag = 'output window, operand 0, single buffered']
    %7 = vsyncpa [#allocation3], 0
    %8 = vsyncpa [#allocation6], 0
    %9 = vsyncpa [#allocation4], 0
    // Predicated region
    $region2: #{tpu_custom_call.1} parent=1 // pred_check
      _
    $region3: #{tpu_custom_call.1} parent=1 // pred_check_branch
      %11 = sbr.rel (0) target = $region5
    $region4: #{tpu_custom_call.1} parent=1 // pred_region
      %13 = vsyncadd [#allocation3], 0
      %s14 = sshll.u32 %s0, 4
      %s15 = int_to_ptr.hbm [resolvable:$true] %s14
      %s16 = sshll.u32 [#allocation2], 4
      %s17 = int_to_ptr.vmem [resolvable:$true] %s16
      %22 = dma.hbm_to_vmem [thread:$0]  %s15, 512, %s17, [#allocation3], 128, 128, 8
    $region5: #{tpu_custom_call.1} parent=1 // pred_fallthru
      _
    // Predicated region
    $region6: #{tpu_custom_call.1} parent=1 // pred_check
      _
    $region7: #{tpu_custom_call.1} parent=1 // pred_check_branch
      %24 = sbr.rel (0) target = $region9
    $region8: #{tpu_custom_call.1} parent=1 // pred_region
      %26 = vsyncadd [#allocation6], 0
      %s27 = sshll.u32 %s1, 4
      %s28 = int_to_ptr.hbm [resolvable:$true] %s27
      %s29 = sshll.u32 [#allocation5], 4
      %s30 = int_to_ptr.vmem [resolvable:$true] %s29
      %35 = dma.hbm_to_vmem [thread:$0]  %s28, 512, %s30, [#allocation6], 128, 128, 8
    $region9: #{tpu_custom_call.1} parent=1 // pred_fallthru
      _
    // Predicated region
    $region10: #{tpu_custom_call.1} parent=1 // pred_check
      _
    $region11: #{tpu_custom_call.1} parent=1 // pred_check_branch
      %37 = sbr.rel (0) target = $region13
    $region12: #{tpu_custom_call.1} parent=1 // pred_region
      %39 = dma.done [#allocation3], 512
    $region13: #{tpu_custom_call.1} parent=1 // pred_fallthru
      _
    // Predicated region
    $region14: #{tpu_custom_call.1} parent=1 // pred_check
      _
    $region15: #{tpu_custom_call.1} parent=1 // pred_check_branch
      %41 = sbr.rel (0) target = $region17
    $region16: #{tpu_custom_call.1} parent=1 // pred_region
      %43 = dma.done [#allocation6], 512
    $region17: #{tpu_custom_call.1} parent=1 // pred_fallthru
      _
    %v44 = vld [vmem:[#allocation2] sm:$0xff]
    %v45 = vld [vmem:[#allocation2 + $0x8] sm:$0xff]
    %v46 = vld [vmem:[#allocation2 + $0x10] sm:$0xff]
    %v47 = vld [vmem:[#allocation2 + $0x18] sm:$0xff]
    %v48 = vld [vmem:[#allocation5] sm:$0xff]
    %v49 = vld [vmem:[#allocation5 + $0x8] sm:$0xff]
    %v50 = vld [vmem:[#allocation5 + $0x10] sm:$0xff]
    %v51 = vld [vmem:[#allocation5 + $0x18] sm:$0xff]
    %v52 = vmul.f32 %v44, %v48
    %v53 = vmul.f32 %v45, %v49
    %v54 = vmul.f32 %v46, %v50
    %v55 = vmul.f32 %v47, %v51
    %v56 = vadd.f32 %v52, %v53
    %v57 = vadd.f32 %v56, %v54
    %v58 = vadd.f32 %v57, %v55
    %v59 = vrot.slane %v58, 4
    %v60 = vadd.f32 %v58, %v59
    %v61 = vrot.slane %v60, 2
    %v62 = vadd.f32 %v60, %v61
    %v63 = vrot.slane %v62, 1
    %v64 = vadd.f32 %v62, %v63
    %v65 = vmul.f32 %v44, %v44
    %v66 = vmul.f32 %v45, %v45
    %v67 = vmul.f32 %v46, %v46
    %v68 = vmul.f32 %v47, %v47
    %v69 = vadd.f32 %v65, %v66
    %v70 = vadd.f32 %v69, %v67
    %v71 = vadd.f32 %v70, %v68
    %v72 = vrot.slane %v71, 4
    %v73 = vadd.f32 %v71, %v72
    %v74 = vrot.slane %v73, 2
    %v75 = vadd.f32 %v73, %v74
    %v76 = vrot.slane %v75, 1
    %v77 = vadd.f32 %v75, %v76
    %v78 = vmul.f32 %v48, %v48
    %v79 = vmul.f32 %v49, %v49
    %v80 = vmul.f32 %v50, %v50
    %v81 = vmul.f32 %v51, %v51
    %v82 = vadd.f32 %v78, %v79
    %v83 = vadd.f32 %v82, %v80
    %v84 = vadd.f32 %v83, %v81
    %v85 = vrot.slane %v84, 4
    %v86 = vadd.f32 %v84, %v85
    %v87 = vrot.slane %v86, 2
    %v88 = vadd.f32 %v86, %v87
    %v89 = vrot.slane %v88, 1
    %v90 = vadd.f32 %v88, %v89
    %v91 = vmax.f32 %v77, 1e-16
    %v92 = vrsqrt.pop %v91
    %v93 = vmul.f32 %v92, %v91
    %v94 = vmul.f32 %v93, %v92
    %v95 = vmul.f32 0.5, %v94
    %v96 = vsub.f32 1.5, %v95
    %v97 = vmul.f32 %v92, %v96
    %vm98 = vweird.f32 %v91
    %vm99 = vweird.f32 %v92
    %vm100 = vmor %vm98, %vm99
    %v101 = vsel %vm100, %v92, %v97
    %v102 = vmax.f32 %v90, 1e-16
    %v103 = vrsqrt.pop %v102
    %v104 = vmul.f32 %v103, %v102
    %v105 = vmul.f32 %v104, %v103
    %v106 = vmul.f32 0.5, %v105
    %v107 = vsub.f32 1.5, %v106
    %v108 = vmul.f32 %v103, %v107
    %vm109 = vweird.f32 %v102
    %vm110 = vweird.f32 %v103
    %vm111 = vmor %vm109, %vm110
    %v112 = vsel %vm111, %v103, %v108
    %v113 = vmul.f32 %v64, %v101
    %v114 = vmul.f32 %v113, %v112
    %v115 = vsub.f32 1.0, %v114
    %116 = vst [vmem:[#allocation7] sm:$0x1] %v115
    // Predicated region
    $region18: #{tpu_custom_call.1} parent=1 // pred_check
      _
    $region19: #{tpu_custom_call.1} parent=1 // pred_check_branch
      %118 = sbr.rel (0) target = $region21
    $region20: #{tpu_custom_call.1} parent=1 // pred_region
      %120 = vsyncadd [#allocation4], 0
      %s122 = sshll.u32 [#allocation7], 4
      %s123 = int_to_ptr.vmem [resolvable:$true] %s122
      %s124 = sshll.u32 %s2, 4
      %s125 = int_to_ptr.hbm [resolvable:$true] %s124
      %127 = dma.vmem_to_hbm [thread:$0]  %s123, 16, %s125, [#allocation4]
    $region21: #{tpu_custom_call.1} parent=1 // pred_fallthru
      _
    // Predicated region
    $region22: #{tpu_custom_call.1} parent=1 // pred_check
      _
    $region23: #{tpu_custom_call.1} parent=1 // pred_check_branch
      %129 = sbr.rel (0) target = $region25
    $region24: #{tpu_custom_call.1} parent=1 // pred_region
      %131 = dma.done [#allocation4], 16
    $region25: #{tpu_custom_call.1} parent=1 // pred_fallthru
      _
    %132 = vsyncpa [#allocation3], 1
    %133 = vsyncpa [#allocation6], 1
    %134 = vsyncpa [#allocation4], 1

</llo_original>
